<compile_context>
chip_gen: v7x
topology: tpu7x:2x2x1
jax: 0.10.0
libtpu: 0.0.40
codegen_flags: <defaults>
</compile_context>

<pallas_src>
import jax
import jax.numpy as jnp
from jax.experimental import pallas as pl
from jax.experimental.pallas import tpu as pltpu


def sqex_kernel(x_ref, w1t_ref, b1_ref, w2t_ref, b2_ref, o_ref):
    # x_ref: (TN, C, HW)  -- native NCHW layout, spatial on lanes, C on sublanes
    # w1t_ref: (C, R), b1_ref: (1, R), w2t_ref: (R, C), b2_ref: (1, C)
    # o_ref: (TN, C, HW)
    x = x_ref[...]                                        # (TN, C, HW)
    # squeeze: global average pool over spatial (lane / XLU reduction)
    y = jnp.mean(x.astype(jnp.float32), axis=2)           # (TN, C)
    # excitation MLP (tiny; free filler next to the x read/write traffic)
    h = jnp.dot(y, w1t_ref[...], preferred_element_type=jnp.float32) + b1_ref[...]
    h = jnp.maximum(h, 0.0)                               # ReLU     (TN, R)
    s = jnp.dot(h, w2t_ref[...], preferred_element_type=jnp.float32) + b2_ref[...]
    s = jax.nn.sigmoid(s)                                 # Sigmoid  (TN, C)
    # scale: per-channel scalar broadcast along lanes (spatial)
    o_ref[...] = x * s.astype(x.dtype)[:, :, None]        # (TN, C, HW)


def _pick_block_n(n, c, hw, itemsize, vmem_budget_bytes):
    """Largest divisor of n whose double-buffered in+out blocks fit the budget,
    preferring a grid length >= 2 so both v7x TensorCores get work."""
    per_item = c * hw * itemsize
    cap = max(1, vmem_budget_bytes // (4 * per_item))     # 2x in + 2x out bufs
    divisors = [d for d in range(1, n + 1) if n % d == 0 and d <= cap]
    if not divisors:
        return 1
    pref = [d for d in divisors if n // d >= 2]
    return max(pref) if pref else max(divisors)


def sqex_forward(x, w1, b1, w2, b2, *, block_n=None,
                 vmem_limit_bytes=32 * 1024 * 1024):
    """x: (N, C, H, W).  w1: (R, C), b1: (R,), w2: (C, R), b2: (C,)."""
    N, C, H, W = x.shape
    R = w1.shape[0]
    HW = H * W

    # Free, contiguous reshape (no transpose, no extra HBM pass).
    x3 = x.reshape(N, C, HW)                              # (N, C, HW)

    # Pre-transpose the tiny weights so the kernel does plain row-major matmuls.
    w1t = w1.T                       # (C, R)
    w2t = w2.T                       # (R, C)
    b1_2d = b1.reshape(1, R)
    b2_2d = b2.reshape(1, C)

    if block_n is None:
        # Keep the double-buffered x blocks to a fraction of scoped VMEM.
        block_n = _pick_block_n(N, C, HW, x.dtype.itemsize,
                                vmem_budget_bytes=8 * 1024 * 1024)
    grid_n = N // block_n

    out3 = pl.pallas_call(
        sqex_kernel,
        out_shape=jax.ShapeDtypeStruct((N, C, HW), x.dtype),
        grid_spec=pltpu.PrefetchScalarGridSpec(
            num_scalar_prefetch=0,
            grid=(grid_n,),
            in_specs=[
                pl.BlockSpec((block_n, C, HW), lambda n: (n, 0, 0)),  # x
                pl.BlockSpec((C, R), lambda n: (0, 0)),               # W1^T
                pl.BlockSpec((1, R), lambda n: (0, 0)),               # b1
                pl.BlockSpec((R, C), lambda n: (0, 0)),               # W2^T
                pl.BlockSpec((1, C), lambda n: (0, 0)),               # b2
            ],
            out_specs=pl.BlockSpec((block_n, C, HW), lambda n: (n, 0, 0)),
        ),
        compiler_params=pltpu.CompilerParams(
            dimension_semantics=("parallel",),
            vmem_limit_bytes=vmem_limit_bytes,
        ),
    )(x3, w1t, b1_2d, w2t, b2_2d)

    # Free reshape back to NCHW.
    return out3.reshape(N, C, H, W)


def sqex_reference(x, w1, b1, w2, b2):
    """Pure-JAX reference matching the PyTorch forward."""
    y = jnp.mean(x, axis=(2, 3))                     # avg_pool2d -> (N, C)
    y = jnp.maximum(y @ w1.T + b1, 0.0)              # linear1 + ReLU
    y = jax.nn.sigmoid(y @ w2.T + b2)                # linear2 + Sigmoid
    return x * y[:, :, None, None]


if __name__ == "__main__":
    # Small but representative: C = 128 channels, reduction = 16 -> R = 8
    # (n_features % reduction == 0 as the module requires), HW = 256 so the
    # kernel's lane axis (spatial) is 128-dense.
    N, C, H, W = 4, 128, 16, 16
    reduction = 16
    R = C // reduction

    key = jax.random.PRNGKey(0)
    kx, k1, k2, k3, k4 = jax.random.split(key, 5)

    x = jax.random.normal(kx, (N, C, H, W), dtype=jnp.float32)

    # deterministic parameter init (nn.Linear-style uniform bounds)
    bound1 = 1.0 / jnp.sqrt(C)
    w1 = jax.random.uniform(k1, (R, C), jnp.float32, -bound1, bound1)
    b1 = jax.random.uniform(k2, (R,), jnp.float32, -bound1, bound1)
    bound2 = 1.0 / jnp.sqrt(R)
    w2 = jax.random.uniform(k3, (C, R), jnp.float32, -bound2, bound2)
    b2 = jax.random.uniform(k4, (C,), jnp.float32, -bound2, bound2)

    out = jax.block_until_ready(sqex_forward(x, w1, b1, w2, b2))
    ref = sqex_reference(x, w1, b1, w2, b2)

    assert out.shape == (N, C, H, W)
    assert jnp.allclose(out, ref, atol=1e-4, rtol=1e-4), "mismatch vs reference"

    print("KERNEL_OK")
</pallas_src>

<mosaic_0001>
module attributes {stable_mosaic.version = 11 : i64} {
  func.func @sqex_kernel(%arg0: i32, %arg1: memref<2x128x256xf32, #tpu.memory_space<vmem>>, %arg2: memref<128x8xf32, #tpu.memory_space<vmem>>, %arg3: memref<1x8xf32, #tpu.memory_space<vmem>>, %arg4: memref<8x128xf32, #tpu.memory_space<vmem>>, %arg5: memref<1x128xf32, #tpu.memory_space<vmem>>, %arg6: memref<2x128x256xf32, #tpu.memory_space<vmem>>) attributes {dimension_semantics = [#tpu.dimension_semantics<parallel>], iteration_bounds = array<i64: 2>, scalar_prefetch = 0 : i64, scratch_operands = 0 : i64, tpu.core_type = #tpu.core_type<tc>, window_params = [{transform_indices = @transform_0, window_bounds = array<i64: 2, 128, 256>}, {pipeline_mode = #tpu.pipeline_mode<synchronous>, transform_indices = @transform_1, window_bounds = array<i64: 128, 8>}, {pipeline_mode = #tpu.pipeline_mode<synchronous>, transform_indices = @transform_2, window_bounds = array<i64: 1, 8>}, {pipeline_mode = #tpu.pipeline_mode<synchronous>, transform_indices = @transform_3, window_bounds = array<i64: 8, 128>}, {pipeline_mode = #tpu.pipeline_mode<synchronous>, transform_indices = @transform_4, window_bounds = array<i64: 1, 128>}, {transform_indices = @transform_5, window_bounds = array<i64: 2, 128, 256>}]} {
    %c0 = arith.constant 0 : index
    %c0_0 = arith.constant 0 : index
    %c0_1 = arith.constant 0 : index
    %0 = vector.load %arg1[%c0, %c0_0, %c0_1] : memref<2x128x256xf32, #tpu.memory_space<vmem>>, vector<2x128x256xf32>
    %cst = arith.constant dense<0.000000e+00> : vector<2x128xf32>
    %1 = vector.multi_reduction <add>, %0, %cst [2] : vector<2x128x256xf32> to vector<2x128xf32>
    %cst_2 = arith.constant 2.560000e+02 : f32
    %2 = vector.broadcast %cst_2 : f32 to vector<2x128xf32>
    %3 = arith.divf %1, %2 : vector<2x128xf32>
    %c0_3 = arith.constant 0 : index
    %c0_4 = arith.constant 0 : index
    %4 = vector.load %arg2[%c0_3, %c0_4] : memref<128x8xf32, #tpu.memory_space<vmem>>, vector<128x8xf32>
    %cst_5 = arith.constant dense<0.000000e+00> : vector<2x8xf32>
    %5 = tpu.matmul %3, %4, %cst_5 {dimension_numbers = #tpu.dot_dimension_numbers<[1], [0], [0], [1], [0, 0, 1, 1], [], []>} : vector<2x128xf32>, vector<128x8xf32>, vector<2x8xf32> -> vector<2x8xf32>
    %c0_6 = arith.constant 0 : index
    %c0_7 = arith.constant 0 : index
    %6 = vector.load %arg3[%c0_6, %c0_7] : memref<1x8xf32, #tpu.memory_space<vmem>>, vector<1x8xf32>
    %7 = vector.broadcast %6 : vector<1x8xf32> to vector<2x8xf32>
    %8 = arith.addf %5, %7 : vector<2x8xf32>
    %cst_8 = arith.constant 0.000000e+00 : f32
    %9 = vector.broadcast %cst_8 : f32 to vector<2x8xf32>
    %10 = arith.maximumf %8, %9 : vector<2x8xf32>
    %c0_9 = arith.constant 0 : index
    %c0_10 = arith.constant 0 : index
    %11 = vector.load %arg4[%c0_9, %c0_10] : memref<8x128xf32, #tpu.memory_space<vmem>>, vector<8x128xf32>
    %cst_11 = arith.constant dense<0.000000e+00> : vector<2x128xf32>
    %12 = tpu.matmul %10, %11, %cst_11 {dimension_numbers = #tpu.dot_dimension_numbers<[1], [0], [0], [1], [0, 0, 1, 1], [], []>} : vector<2x8xf32>, vector<8x128xf32>, vector<2x128xf32> -> vector<2x128xf32>
    %c0_12 = arith.constant 0 : index
    %c0_13 = arith.constant 0 : index
    %13 = vector.load %arg5[%c0_12, %c0_13] : memref<1x128xf32, #tpu.memory_space<vmem>>, vector<1x128xf32>
    %14 = vector.broadcast %13 : vector<1x128xf32> to vector<2x128xf32>
    %15 = arith.addf %12, %14 : vector<2x128xf32>
    %16 = arith.negf %15 : vector<2x128xf32>
    %17 = math.exp %16 : vector<2x128xf32>
    %cst_14 = arith.constant 1.000000e+00 : f32
    %18 = vector.broadcast %cst_14 : f32 to vector<2x128xf32>
    %19 = arith.addf %18, %17 : vector<2x128xf32>
    %20 = arith.divf %18, %19 : vector<2x128xf32>
    %21 = vector.shape_cast %20 : vector<2x128xf32> to vector<2x128x1xf32>
    %22 = vector.broadcast %21 : vector<2x128x1xf32> to vector<2x128x256xf32>
    %23 = arith.mulf %0, %22 : vector<2x128x256xf32>
    %c0_15 = arith.constant 0 : index
    %c0_16 = arith.constant 0 : index
    %c0_17 = arith.constant 0 : index
    %24 = vector.load %arg6[%c0_15, %c0_16, %c0_17] : memref<2x128x256xf32, #tpu.memory_space<vmem>>, vector<2x128x256xf32>
    tpu.vector_store %arg6[%c0_15, %c0_16, %c0_17], %23 {strides = array<i32>} : memref<2x128x256xf32, #tpu.memory_space<vmem>>, vector<2x128x256xf32>,
    return
  }
  func.func @transform_0(%arg0: i32) -> (i32, i32, i32) {
    %c0_i32 = arith.constant 0 : i32
    %c0_i32_0 = arith.constant 0 : i32
    %c0_i32_1 = arith.constant 0 : i32
    return %arg0, %c0_i32, %c0_i32_0 : i32, i32, i32
  }
  func.func @transform_1(%arg0: i32) -> (i32, i32) {
    %c0_i32 = arith.constant 0 : i32
    %c0_i32_0 = arith.constant 0 : i32
    %c0_i32_1 = arith.constant 0 : i32
    return %c0_i32, %c0_i32_0 : i32, i32
  }
  func.func @transform_2(%arg0: i32) -> (i32, i32) {
    %c0_i32 = arith.constant 0 : i32
    %c0_i32_0 = arith.constant 0 : i32
    %c0_i32_1 = arith.constant 0 : i32
    return %c0_i32, %c0_i32_0 : i32, i32
  }
  func.func @transform_3(%arg0: i32) -> (i32, i32) {
    %c0_i32 = arith.constant 0 : i32
    %c0_i32_0 = arith.constant 0 : i32
    %c0_i32_1 = arith.constant 0 : i32
    return %c0_i32, %c0_i32_0 : i32, i32
  }
  func.func @transform_4(%arg0: i32) -> (i32, i32) {
    %c0_i32 = arith.constant 0 : i32
    %c0_i32_0 = arith.constant 0 : i32
    %c0_i32_1 = arith.constant 0 : i32
    return %c0_i32, %c0_i32_0 : i32, i32
  }
  func.func @transform_5(%arg0: i32) -> (i32, i32, i32) {
    %c0_i32 = arith.constant 0 : i32
    %c0_i32_0 = arith.constant 0 : i32
    %c0_i32_1 = arith.constant 0 : i32
    return %arg0, %c0_i32, %c0_i32_0 : i32, i32, i32
  }
}

</mosaic_0001>

<llo_original>
// kernel: tpu_custom_call.1
$region0: #{tpu_custom_call.1}
  #allocation0 [shape = 'u32[]', space=smem, size = 0x4, offset = 0x4, fixed_abs, tag = 'smem constant byte address 0x4 - core index']
  #allocation1 [shape = 'u32[144,128]{1,0:T(1,128)}', space=vmem, size = 0x12000, scoped, tag = 'internal scratch']
  %s0 = inlined_call_operand.hbm [shape: f32[4,128,256], index: 0, kind: input, shape index: {}]
  %s1 = inlined_call_operand.vmem [shape: f32[128,8], index: 1, kind: input, shape index: {}]
  %s2 = inlined_call_operand.vmem [shape: f32[1,8], index: 2, kind: input, shape index: {}]
  %s3 = inlined_call_operand.vmem [shape: f32[8,128], index: 3, kind: input, shape index: {}]
  %s4 = inlined_call_operand.vmem [shape: f32[1,128], index: 4, kind: input, shape index: {}]
  %s5 = inlined_call_operand.hbm [shape: f32[4,128,256], index: 5, kind: output, shape index: {}]
  %s6 = sld [smem:[#allocation0]]
  $region57: #{tpu_custom_call.1} parent=0
    _
  %s8 = ssub.s32 1, %s6
  %s9 = scalar_select 0, %s8, %s6
  $region1: #{tpu_custom_call.1} parent=0
    #allocation2 [shape = 'u8[524288]{0}', space=vmem, size = 0x80000, scoped, tag = 'input window, operand 0']
    #allocation3 [shape = 's32[2]{0}', space=sflag, size = 0x8, scoped, tag = 'scoped memory for tpu_custom_call.1']
    #allocation4 [shape = 's32[2]{0}', space=sflag, size = 0x8, scoped, tag = 'scoped memory for tpu_custom_call.1']
    #allocation5 [shape = 'u8[524288]{0}', space=vmem, size = 0x80000, scoped, tag = 'output window, operand 0']
    %10 = vsyncpa [#allocation3], 0
    %s11 = scalar_lea.sflag [#allocation3], 1
    %12 = vsyncpa %s11, 0
    %13 = vsyncpa [#allocation4], 0
    %s14 = scalar_lea.sflag [#allocation4], 1
    %15 = vsyncpa %s14, 0
    loop: start=0, step=1, limit=4
    $region2: #{tpu_custom_call.1} parent=1 // loop_pre_header
      _
    $region3: #{tpu_custom_call.1} parent=1 // loop_header
      %s17 = sphi 0, %s21
      %p18 = scmp.ge.s32.totalorder %s17, 4
      %s27 = sphi 0, %s29
      %s30 = sphi 0, %s27
      %s31 = sphi 0, %s30
      %s47 = sphi 0, %s31
      %s51 = sphi 0, %s51
      %s53 = sphi 0, %s51
      %s54 = sphi 0, %s53
      %s68 = sphi 0, %s54
      %s72 = sphi 0, %s72
      %s74 = sphi 0, %s72
      %s75 = sphi 0, %s74
      %s89 = sphi 0, %s75
      %s93 = sphi 0, %s93
      %s95 = sphi 0, %s93
      %s96 = sphi 0, %s95
      %s110 = sphi 0, %s96
      %s114 = sphi 0, %s114
      %s116 = sphi 0, %s114
      %s117 = sphi 0, %s116
      %s131 = sphi 0, %s117
      %s137 = sphi 0, %s139
      %s140 = sphi 0, %s137
      %s141 = sphi 0, %s140
      %s157 = sphi 0, %s141
    $region4: #{tpu_custom_call.1} parent=1 // loop_header_branch
      %20 = sbr.rel (%p18) target = $region8
    $region5: #{tpu_custom_call.1} parent=1 // loop_body
      %s22 = ssub.s32 %s17, 1
      %s23 = ssub.s32 %s17, 2
      %s24 = sadd.s32 %s17, 1
      %s25 = ssub.s32 %s17, %s24
      %p26 = scmp.eq.s32.totalorder %s25, 0
      %s28 = sadd.s32 %s27, 1
      %s29 = scalar_select %p26, %s27, %s28
      %p32 = pneg %p26
      %p33 = scmp.eq.s32.totalorder %s17, 1
      %p34 = por %p32, %p33
      %p35 = scmp.ne.s32.totalorder %s27, %s30
      %p36 = scmp.eq.s32.totalorder %s17, 0
      %p37 = por %p35, %p36
      %p38 = scmp.ne.s32.totalorder %s27, %s30
      %p39 = scmp.eq.s32.totalorder %s22, 1
      %p40 = por %p38, %p39
      %p41 = scmp.ne.s32.totalorder %s30, %s31
      %p42 = scmp.eq.s32.totalorder %s22, 0
      %p43 = por %p41, %p42
      %p44 = scmp.ne.s32.totalorder %s30, %s31
      %p45 = scmp.eq.s32.totalorder %s23, 1
      %p46 = por %p44, %p45
      %p48 = scmp.ne.s32.totalorder %s31, %s47
      %p49 = scmp.eq.s32.totalorder %s23, 0
      %p50 = por %p48, %p49
      %s52 = sadd.s32 %s51, 1
      %p55 = scmp.eq.s32.totalorder %s17, 1
      %p56 = scmp.ne.s32.totalorder %s51, %s53
      %p57 = scmp.eq.s32.totalorder %s17, 0
      %p58 = por %p56, %p57
      %p59 = scmp.ne.s32.totalorder %s51, %s53
      %p60 = scmp.eq.s32.totalorder %s22, 1
      %p61 = por %p59, %p60
      %p62 = scmp.ne.s32.totalorder %s53, %s54
      %p63 = scmp.eq.s32.totalorder %s22, 0
      %p64 = por %p62, %p63
      %p65 = scmp.ne.s32.totalorder %s53, %s54
      %p66 = scmp.eq.s32.totalorder %s23, 1
      %p67 = por %p65, %p66
      %p69 = scmp.ne.s32.totalorder %s54, %s68
      %p70 = scmp.eq.s32.totalorder %s23, 0
      %p71 = por %p69, %p70
      %s73 = sadd.s32 %s72, 1
      %p76 = scmp.eq.s32.totalorder %s17, 1
      %p77 = scmp.ne.s32.totalorder %s72, %s74
      %p78 = scmp.eq.s32.totalorder %s17, 0
      %p79 = por %p77, %p78
      %p80 = scmp.ne.s32.totalorder %s72, %s74
      %p81 = scmp.eq.s32.totalorder %s22, 1
      %p82 = por %p80, %p81
      %p83 = scmp.ne.s32.totalorder %s74, %s75
      %p84 = scmp.eq.s32.totalorder %s22, 0
      %p85 = por %p83, %p84
      %p86 = scmp.ne.s32.totalorder %s74, %s75
      %p87 = scmp.eq.s32.totalorder %s23, 1
      %p88 = por %p86, %p87
      %p90 = scmp.ne.s32.totalorder %s75, %s89
      %p91 = scmp.eq.s32.totalorder %s23, 0
      %p92 = por %p90, %p91
      %s94 = sadd.s32 %s93, 1
      %p97 = scmp.eq.s32.totalorder %s17, 1
      %p98 = scmp.ne.s32.totalorder %s93, %s95
      %p99 = scmp.eq.s32.totalorder %s17, 0
      %p100 = por %p98, %p99
      %p101 = scmp.ne.s32.totalorder %s93, %s95
      %p102 = scmp.eq.s32.totalorder %s22, 1
      %p103 = por %p101, %p102
      %p104 = scmp.ne.s32.totalorder %s95, %s96
      %p105 = scmp.eq.s32.totalorder %s22, 0
      %p106 = por %p104, %p105
      %p107 = scmp.ne.s32.totalorder %s95, %s96
      %p108 = scmp.eq.s32.totalorder %s23, 1
      %p109 = por %p107, %p108
      %p111 = scmp.ne.s32.totalorder %s96, %s110
      %p112 = scmp.eq.s32.totalorder %s23, 0
      %p113 = por %p111, %p112
      %s115 = sadd.s32 %s114, 1
      %p118 = scmp.eq.s32.totalorder %s17, 1
      %p119 = scmp.ne.s32.totalorder %s114, %s116
      %p120 = scmp.eq.s32.totalorder %s17, 0
      %p121 = por %p119, %p120
      %p122 = scmp.ne.s32.totalorder %s114, %s116
      %p123 = scmp.eq.s32.totalorder %s22, 1
      %p124 = por %p122, %p123
      %p125 = scmp.ne.s32.totalorder %s116, %s117
      %p126 = scmp.eq.s32.totalorder %s22, 0
      %p127 = por %p125, %p126
      %p128 = scmp.ne.s32.totalorder %s116, %s117
      %p129 = scmp.eq.s32.totalorder %s23, 1
      %p130 = por %p128, %p129
      %p132 = scmp.ne.s32.totalorder %s117, %s131
      %p133 = scmp.eq.s32.totalorder %s23, 0
      %p134 = por %p132, %p133
      %s135 = ssub.s32 %s17, %s24
      %p136 = scmp.eq.s32.totalorder %s135, 0
      %s138 = sadd.s32 %s137, 1
      %s139 = scalar_select %p136, %s137, %s138
      %p142 = pneg %p136
      %p143 = scmp.eq.s32.totalorder %s17, 1
      %p144 = por %p142, %p143
      %p145 = scmp.ne.s32.totalorder %s137, %s140
      %p146 = scmp.eq.s32.totalorder %s17, 0
      %p147 = por %p145, %p146
      %p148 = scmp.ne.s32.totalorder %s137, %s140
      %p149 = scmp.eq.s32.totalorder %s22, 1
      %p150 = por %p148, %p149
      %p151 = scmp.ne.s32.totalorder %s140, %s141
      %p152 = scmp.eq.s32.totalorder %s22, 0
      %p153 = por %p151, %p152
      %p154 = scmp.ne.s32.totalorder %s140, %s141
      %p155 = scmp.eq.s32.totalorder %s23, 1
      %p156 = por %p154, %p155
      %p158 = scmp.ne.s32.totalorder %s141, %s157
      %p159 = scmp.eq.s32.totalorder %s23, 0
      %p160 = por %p158, %p159
      %p161 = scmp.le.s32.totalorder 1, %s17
      %p162 = scmp.lt.s32.totalorder %s17, 3
      %p163 = pnand %p161, %p162
      %p164 = pneg %p163
      // Predicated region
      $region9: #{tpu_custom_call.1} parent=5 // pred_check
        _
      $region10: #{tpu_custom_call.1} parent=5 // pred_check_branch
        %166 = sbr.rel (%p163) target = $region12
      $region11: #{tpu_custom_call.1} parent=5 // pred_region
        %s167 = ssub.s32 %s17, 1
        // Predicated region
        $region13: #{tpu_custom_call.1} parent=11 // pred_check
          %p168 = pneg %p64
        $region14: #{tpu_custom_call.1} parent=11 // pred_check_branch
          %170 = sbr.rel (%p168) target = $region16
        $region15: #{tpu_custom_call.1} parent=11 // pred_region
          _
        $region16: #{tpu_custom_call.1} parent=11 // pred_fallthru
          _
        // Predicated region
        $region17: #{tpu_custom_call.1} parent=11 // pred_check
          %p171 = pneg %p85
        $region18: #{tpu_custom_call.1} parent=11 // pred_check_branch
          %173 = sbr.rel (%p171) target = $region20
        $region19: #{tpu_custom_call.1} parent=11 // pred_region
          _
        $region20: #{tpu_custom_call.1} parent=11 // pred_fallthru
          _
        // Predicated region
        $region21: #{tpu_custom_call.1} parent=11 // pred_check
          %p174 = pneg %p106
        $region22: #{tpu_custom_call.1} parent=11 // pred_check_branch
          %176 = sbr.rel (%p174) target = $region24
        $region23: #{tpu_custom_call.1} parent=11 // pred_region
          _
        $region24: #{tpu_custom_call.1} parent=11 // pred_fallthru
          _
        // Predicated region
        $region25: #{tpu_custom_call.1} parent=11 // pred_check
          %p177 = pneg %p127
        $region26: #{tpu_custom_call.1} parent=11 // pred_check_branch
          %179 = sbr.rel (%p177) target = $region28
        $region27: #{tpu_custom_call.1} parent=11 // pred_region
          _
        $region28: #{tpu_custom_call.1} parent=11 // pred_fallthru
          _
      $region12: #{tpu_custom_call.1} parent=5 // pred_fallthru
        _
      %p180 = scmp.lt.s32.totalorder %s17, 2
      // Predicated region
      $region29: #{tpu_custom_call.1} parent=5 // pred_check
        %p181 = pneg %p180
      $region30: #{tpu_custom_call.1} parent=5 // pred_check_branch
        %183 = sbr.rel (%p181) target = $region32
      $region31: #{tpu_custom_call.1} parent=5 // pred_region
        // Predicated region
        $region33: #{tpu_custom_call.1} parent=31 // pred_check
          %p184 = pneg %p37
        $region34: #{tpu_custom_call.1} parent=31 // pred_check_branch
          %186 = sbr.rel (%p184) target = $region36
        $region35: #{tpu_custom_call.1} parent=31 // pred_region
          %s187 = sand.u32 %s27, 1
          %s188 = scalar_lea.sflag [#allocation3], %s187
          %s189 = sand.u32 %s27, 1
          %s190 = smul.addr %s189, 512
          %s191 = scalar_lea.vmem [#allocation2], %s190
          %s192 = smul.u32 2, %s17
          %s194 = ssub.s32 8192, 8192
          %195 = vsyncadd %s188, %s194
          %s196 = smul.addr %s192, 32
          %s197 = smul.addr %s196, 128
          %s198 = scalar_lea.hbm %s0, %s197
          %s199 = sshll.u32 %s191, 4
          %s200 = int_to_ptr.vmem [resolvable:$true] %s199
          %205 = dma.hbm_to_vmem [thread:$0]  %s198, 8192, %s200, %s188, 256, 256, 16
        $region36: #{tpu_custom_call.1} parent=31 // pred_fallthru
          _
      $region32: #{tpu_custom_call.1} parent=5 // pred_fallthru
        _
      %p206 = scmp.le.s32.totalorder 1, %s17
      %p207 = scmp.lt.s32.totalorder %s17, 3
      %p208 = pnand %p206, %p207
      %p209 = pneg %p208
      // Predicated region
      $region37: #{tpu_custom_call.1} parent=5 // pred_check
        _
      $region38: #{tpu_custom_call.1} parent=5 // pred_check_branch
        %211 = sbr.rel (%p208) target = $region40
      $region39: #{tpu_custom_call.1} parent=5 // pred_region
        %s212 = ssub.s32 %s17, 1
        %s213 = sand.u32 %s30, 1
        %s214 = scalar_lea.sflag [#allocation3], %s213
        %s215 = sand.u32 %s30, 1
        %s216 = smul.addr %s215, 512
        %s217 = scalar_lea.vmem [#allocation2], %s216
        // Predicated region
        $region41: #{tpu_custom_call.1} parent=39 // pred_check
          %p218 = pneg %p43
        $region42: #{tpu_custom_call.1} parent=39 // pred_check_branch
          %220 = sbr.rel (%p218) target = $region44
        $region43: #{tpu_custom_call.1} parent=39 // pred_region
          %221 = dma.done %s214, 8192
        $region44: #{tpu_custom_call.1} parent=39 // pred_fallthru
          _
        %s222 = sand.u32 %s30, 1
        %s223 = scalar_lea.sflag [#allocation3], %s222
        %s224 = sand.u32 %s30, 1
        %s225 = smul.addr %s224, 512
        %s226 = scalar_lea.vmem [#allocation2], %s225
        %p227 = pneg %p43
        %p228 = pneg %p40
        %p229 = pneg %p64
        %p230 = pneg %p61
        %p231 = pneg %p85
        %p232 = pneg %p82
        %p233 = pneg %p106
        %p234 = pneg %p103
        %p235 = pneg %p127
        %p236 = pneg %p124
        %p237 = pneg %p153
        %p238 = pneg %p150
        %s239 = sand.u32 %s140, 1
        %s240 = scalar_lea.sflag [#allocation4], %s239
        %s241 = sand.u32 %s140, 1
        %s242 = smul.addr %s241, 512
        %s243 = scalar_lea.vmem [#allocation5], %s242
        %s244 = smul.u32 2, %s22
        %s245 = smul.u32 2, %s22
        %v246 = vld [vmem:[%s217] sm:$0xff]
        %v247 = vld [vmem:[%s217 + $0x8] sm:$0xff]
        %v248 = vld [vmem:[%s217 + $0x10] sm:$0xff]
        %v249 = vld [vmem:[%s217 + $0x18] sm:$0xff]
        %v250 = vld [vmem:[%s217 + $0x20] sm:$0xff]
        %v251 = vld [vmem:[%s217 + $0x28] sm:$0xff]
        %v252 = vld [vmem:[%s217 + $0x30] sm:$0xff]
        %v253 = vld [vmem:[%s217 + $0x38] sm:$0xff]
        %v254 = vld [vmem:[%s217 + $0x40] sm:$0xff]
        %v255 = vld [vmem:[%s217 + $0x48] sm:$0xff]
        %v256 = vld [vmem:[%s217 + $0x50] sm:$0xff]
        %v257 = vld [vmem:[%s217 + $0x58] sm:$0xff]
        %v258 = vld [vmem:[%s217 + $0x60] sm:$0xff]
        %v259 = vld [vmem:[%s217 + $0x68] sm:$0xff]
        %v260 = vld [vmem:[%s217 + $0x70] sm:$0xff]
        %v261 = vld [vmem:[%s217 + $0x78] sm:$0xff]
        %v262 = vld [vmem:[%s217 + $0x80] sm:$0xff]
        %v263 = vld [vmem:[%s217 + $0x88] sm:$0xff]
        %v264 = vld [vmem:[%s217 + $0x90] sm:$0xff]
        %v265 = vld [vmem:[%s217 + $0x98] sm:$0xff]
        %v266 = vld [vmem:[%s217 + $0xa0] sm:$0xff]
        %v267 = vld [vmem:[%s217 + $0xa8] sm:$0xff]
        %v268 = vld [vmem:[%s217 + $0xb0] sm:$0xff]
        %v269 = vld [vmem:[%s217 + $0xb8] sm:$0xff]
        %v270 = vld [vmem:[%s217 + $0xc0] sm:$0xff]
        %v271 = vld [vmem:[%s217 + $0xc8] sm:$0xff]
        %v272 = vld [vmem:[%s217 + $0xd0] sm:$0xff]
        %v273 = vld [vmem:[%s217 + $0xd8] sm:$0xff]
        %v274 = vld [vmem:[%s217 + $0xe0] sm:$0xff]
        %v275 = vld [vmem:[%s217 + $0xe8] sm:$0xff]
        %v276 = vld [vmem:[%s217 + $0xf0] sm:$0xff]
        %v277 = vld [vmem:[%s217 + $0xf8] sm:$0xff]
        %v278 = vld [vmem:[%s217 + $0x100] sm:$0xff]
        %v279 = vld [vmem:[%s217 + $0x108] sm:$0xff]
        %v280 = vld [vmem:[%s217 + $0x110] sm:$0xff]
        %v281 = vld [vmem:[%s217 + $0x118] sm:$0xff]
        %v282 = vld [vmem:[%s217 + $0x120] sm:$0xff]
        %v283 = vld [vmem:[%s217 + $0x128] sm:$0xff]
        %v284 = vld [vmem:[%s217 + $0x130] sm:$0xff]
        %v285 = vld [vmem:[%s217 + $0x138] sm:$0xff]
        %v286 = vld [vmem:[%s217 + $0x140] sm:$0xff]
        %v287 = vld [vmem:[%s217 + $0x148] sm:$0xff]
        %v288 = vld [vmem:[%s217 + $0x150] sm:$0xff]
        %v289 = vld [vmem:[%s217 + $0x158] sm:$0xff]
        %v290 = vld [vmem:[%s217 + $0x160] sm:$0xff]
        %v291 = vld [vmem:[%s217 + $0x168] sm:$0xff]
        %v292 = vld [vmem:[%s217 + $0x170] sm:$0xff]
        %v293 = vld [vmem:[%s217 + $0x178] sm:$0xff]
        %v294 = vld [vmem:[%s217 + $0x180] sm:$0xff]
        %v295 = vld [vmem:[%s217 + $0x188] sm:$0xff]
        %v296 = vld [vmem:[%s217 + $0x190] sm:$0xff]
        %v297 = vld [vmem:[%s217 + $0x198] sm:$0xff]
        %v298 = vld [vmem:[%s217 + $0x1a0] sm:$0xff]
        %v299 = vld [vmem:[%s217 + $0x1a8] sm:$0xff]
        %v300 = vld [vmem:[%s217 + $0x1b0] sm:$0xff]
        %v301 = vld [vmem:[%s217 + $0x1b8] sm:$0xff]
        %v302 = vld [vmem:[%s217 + $0x1c0] sm:$0xff]
        %v303 = vld [vmem:[%s217 + $0x1c8] sm:$0xff]
        %v304 = vld [vmem:[%s217 + $0x1d0] sm:$0xff]
        %v305 = vld [vmem:[%s217 + $0x1d8] sm:$0xff]
        %v306 = vld [vmem:[%s217 + $0x1e0] sm:$0xff]
        %v307 = vld [vmem:[%s217 + $0x1e8] sm:$0xff]
        %v308 = vld [vmem:[%s217 + $0x1f0] sm:$0xff]
        %v309 = vld [vmem:[%s217 + $0x1f8] sm:$0xff]
        %v310 = vadd.f32 %v246, %v247
        %311 = vadd.xlane.f32.xlu0 %v310
        %v312 = vpop.xlane.xlu0 %311
        %v313 = vadd.f32 %v248, %v249
        %314 = vadd.xlane.f32.xlu0 %v313
        %v315 = vpop.xlane.xlu0 %314
        %v316 = vadd.f32 %v250, %v251
        %317 = vadd.xlane.f32.xlu0 %v316
        %v318 = vpop.xlane.xlu0 %317
        %v319 = vadd.f32 %v252, %v253
        %320 = vadd.xlane.f32.xlu0 %v319
        %v321 = vpop.xlane.xlu0 %320
        %v322 = vadd.f32 %v254, %v255
        %323 = vadd.xlane.f32.xlu0 %v322
        %v324 = vpop.xlane.xlu0 %323
        %v325 = vadd.f32 %v256, %v257
        %326 = vadd.xlane.f32.xlu0 %v325
        %v327 = vpop.xlane.xlu0 %326
        %v328 = vadd.f32 %v258, %v259
        %329 = vadd.xlane.f32.xlu0 %v328
        %v330 = vpop.xlane.xlu0 %329
        %v331 = vadd.f32 %v260, %v261
        %332 = vadd.xlane.f32.xlu0 %v331
        %v333 = vpop.xlane.xlu0 %332
        %v334 = vadd.f32 %v262, %v263
        %335 = vadd.xlane.f32.xlu0 %v334
        %v336 = vpop.xlane.xlu0 %335
        %v337 = vadd.f32 %v264, %v265
        %338 = vadd.xlane.f32.xlu0 %v337
        %v339 = vpop.xlane.xlu0 %338
        %v340 = vadd.f32 %v266, %v267
        %341 = vadd.xlane.f32.xlu0 %v340
        %v342 = vpop.xlane.xlu0 %341
        %v343 = vadd.f32 %v268, %v269
        %344 = vadd.xlane.f32.xlu0 %v343
        %v345 = vpop.xlane.xlu0 %344
        %v346 = vadd.f32 %v270, %v271
        %347 = vadd.xlane.f32.xlu0 %v346
        %v348 = vpop.xlane.xlu0 %347
        %v349 = vadd.f32 %v272, %v273
        %350 = vadd.xlane.f32.xlu0 %v349
        %v351 = vpop.xlane.xlu0 %350
        %v352 = vadd.f32 %v274, %v275
        %353 = vadd.xlane.f32.xlu0 %v352
        %v354 = vpop.xlane.xlu0 %353
        %v355 = vadd.f32 %v276, %v277
        %356 = vadd.xlane.f32.xlu0 %v355
        %v357 = vpop.xlane.xlu0 %356
        %v358 = vadd.f32 %v278, %v279
        %359 = vadd.xlane.f32.xlu0 %v358
        %v360 = vpop.xlane.xlu0 %359
        %v361 = vadd.f32 %v280, %v281
        %362 = vadd.xlane.f32.xlu0 %v361
        %v363 = vpop.xlane.xlu0 %362
        %v364 = vadd.f32 %v282, %v283
        %365 = vadd.xlane.f32.xlu0 %v364
        %v366 = vpop.xlane.xlu0 %365
        %v367 = vadd.f32 %v284, %v285
        %368 = vadd.xlane.f32.xlu0 %v367
        %v369 = vpop.xlane.xlu0 %368
        %v370 = vadd.f32 %v286, %v287
        %371 = vadd.xlane.f32.xlu0 %v370
        %v372 = vpop.xlane.xlu0 %371
        %v373 = vadd.f32 %v288, %v289
        %374 = vadd.xlane.f32.xlu0 %v373
        %v375 = vpop.xlane.xlu0 %374
        %v376 = vadd.f32 %v290, %v291
        %377 = vadd.xlane.f32.xlu0 %v376
        %v378 = vpop.xlane.xlu0 %377
        %v379 = vadd.f32 %v292, %v293
        %380 = vadd.xlane.f32.xlu0 %v379
        %v381 = vpop.xlane.xlu0 %380
        %v382 = vadd.f32 %v294, %v295
        %383 = vadd.xlane.f32.xlu0 %v382
        %v384 = vpop.xlane.xlu0 %383
        %v385 = vadd.f32 %v296, %v297
        %386 = vadd.xlane.f32.xlu0 %v385
        %v387 = vpop.xlane.xlu0 %386
        %v388 = vadd.f32 %v298, %v299
        %389 = vadd.xlane.f32.xlu0 %v388
        %v390 = vpop.xlane.xlu0 %389
        %v391 = vadd.f32 %v300, %v301
        %392 = vadd.xlane.f32.xlu0 %v391
        %v393 = vpop.xlane.xlu0 %392
        %v394 = vadd.f32 %v302, %v303
        %395 = vadd.xlane.f32.xlu0 %v394
        %v396 = vpop.xlane.xlu0 %395
        %v397 = vadd.f32 %v304, %v305
        %398 = vadd.xlane.f32.xlu0 %v397
        %v399 = vpop.xlane.xlu0 %398
        %v400 = vadd.f32 %v306, %v307
        %401 = vadd.xlane.f32.xlu0 %v400
        %v402 = vpop.xlane.xlu0 %401
        %v403 = vadd.f32 %v308, %v309
        %404 = vadd.xlane.f32.xlu0 %v403
        %v405 = vpop.xlane.xlu0 %404
        %v406 = vrcp.pop 256.0
        %v407 = vmul.f32 %v312, %v406
        %v408 = vmul.f32 %v315, %v406
        %v409 = vmul.f32 %v318, %v406
        %v410 = vmul.f32 %v321, %v406
        %v411 = vmul.f32 %v324, %v406
        %v412 = vmul.f32 %v327, %v406
        %v413 = vmul.f32 %v330, %v406
        %v414 = vmul.f32 %v333, %v406
        %v415 = vmul.f32 %v336, %v406
        %v416 = vmul.f32 %v339, %v406
        %v417 = vmul.f32 %v342, %v406
        %v418 = vmul.f32 %v345, %v406
        %v419 = vmul.f32 %v348, %v406
        %v420 = vmul.f32 %v351, %v406
        %v421 = vmul.f32 %v354, %v406
        %v422 = vmul.f32 %v357, %v406
        %v423 = vmul.f32 %v360, %v406
        %v424 = vmul.f32 %v363, %v406
        %v425 = vmul.f32 %v366, %v406
        %v426 = vmul.f32 %v369, %v406
        %v427 = vmul.f32 %v372, %v406
        %v428 = vmul.f32 %v375, %v406
        %v429 = vmul.f32 %v378, %v406
        %v430 = vmul.f32 %v381, %v406
        %v431 = vmul.f32 %v384, %v406
        %v432 = vmul.f32 %v387, %v406
        %v433 = vmul.f32 %v390, %v406
        %v434 = vmul.f32 %v393, %v406
        %v435 = vmul.f32 %v396, %v406
        %v436 = vmul.f32 %v399, %v406
        %v437 = vmul.f32 %v402, %v406
        %v438 = vmul.f32 %v405, %v406
        %v439 = vld [vmem:[%s1] sm:$0xff]
        %v440 = vld [vmem:[%s1 + $0x8] sm:$0xff]
        %v441 = vld [vmem:[%s1 + $0x10] sm:$0xff]
        %v442 = vld [vmem:[%s1 + $0x18] sm:$0xff]
        %v443 = vld [vmem:[%s1 + $0x20] sm:$0xff]
        %v444 = vld [vmem:[%s1 + $0x28] sm:$0xff]
        %v445 = vld [vmem:[%s1 + $0x30] sm:$0xff]
        %v446 = vld [vmem:[%s1 + $0x38] sm:$0xff]
        %v447 = vld [vmem:[%s1 + $0x40] sm:$0xff]
        %v448 = vld [vmem:[%s1 + $0x48] sm:$0xff]
        %v449 = vld [vmem:[%s1 + $0x50] sm:$0xff]
        %v450 = vld [vmem:[%s1 + $0x58] sm:$0xff]
        %v451 = vld [vmem:[%s1 + $0x60] sm:$0xff]
        %v452 = vld [vmem:[%s1 + $0x68] sm:$0xff]
        %v453 = vld [vmem:[%s1 + $0x70] sm:$0xff]
        %v454 = vld [vmem:[%s1 + $0x78] sm:$0xff]
        %v455 = vld [vmem:[%s2] sm:$0x1]
        %v457 = vlaneseq
        %v458 = vshrl.u32 %v457, 7
        %v459 = vsub.s32 0, %v458
        %v460 = vrot.slane %v455, %v459
        %v494 = vlaneseq
        %v495 = vand.u32 %v494, 127
        %v496 = vlaneseq
        %v497 = vshrl.u32 %v496, 7
        %v498 = vsub.s32 %v495, %v497
        %v499 = vrot.slane %v407, %v498
        %v500 = vadd.s32 %v495, 4294967288
        %v501 = vlaneseq
        %v502 = vshrl.u32 %v501, 7
        %v503 = vsub.s32 %v500, %v502
        %v504 = vrot.slane %v408, %v503
        %vm505 = vcmask 130112
        %v506 = vsel %vm505, %v504, %v499
        %v507 = vadd.s32 %v495, 4294967280
        %v508 = vlaneseq
        %v509 = vshrl.u32 %v508, 7
        %v510 = vsub.s32 %v507, %v509
        %v511 = vrot.slane %v409, %v510
        %vm512 = vcmask 195712
        %v513 = vsel %vm512, %v511, %v506
        %v514 = vadd.s32 %v495, 4294967272
        %v515 = vlaneseq
        %v516 = vshrl.u32 %v515, 7
        %v517 = vsub.s32 %v514, %v516
        %v518 = vrot.slane %v410, %v517
        %vm519 = vcmask 261312
        %v520 = vsel %vm519, %v518, %v513
        %v521 = vadd.s32 %v495, 4294967264
        %v522 = vlaneseq
        %v523 = vshrl.u32 %v522, 7
        %v524 = vsub.s32 %v521, %v523
        %v525 = vrot.slane %v411, %v524
        %vm526 = vcmask 326912
        %v527 = vsel %vm526, %v525, %v520
        %v528 = vadd.s32 %v495, 4294967256
        %v529 = vlaneseq
        %v530 = vshrl.u32 %v529, 7
        %v531 = vsub.s32 %v528, %v530
        %v532 = vrot.slane %v412, %v531
        %vm533 = vcmask 392512
        %v534 = vsel %vm533, %v532, %v527
        %v535 = vadd.s32 %v495, 4294967248
        %v536 = vlaneseq
        %v537 = vshrl.u32 %v536, 7
        %v538 = vsub.s32 %v535, %v537
        %v539 = vrot.slane %v413, %v538
        %vm540 = vcmask 458112
        %v541 = vsel %vm540, %v539, %v534
        %v542 = vadd.s32 %v495, 4294967240
        %v543 = vlaneseq
        %v544 = vshrl.u32 %v543, 7
        %v545 = vsub.s32 %v542, %v544
        %v546 = vrot.slane %v414, %v545
        %vm547 = vcmask 523712
        %v548 = vsel %vm547, %v546, %v541
        %v549 = vadd.s32 %v495, 4294967232
        %v550 = vlaneseq
        %v551 = vshrl.u32 %v550, 7
        %v552 = vsub.s32 %v549, %v551
        %v553 = vrot.slane %v415, %v552
        %vm554 = vcmask 589312
        %v555 = vsel %vm554, %v553, %v548
        %v556 = vadd.s32 %v495, 4294967224
        %v557 = vlaneseq
        %v558 = vshrl.u32 %v557, 7
        %v559 = vsub.s32 %v556, %v558
        %v560 = vrot.slane %v416, %v559
        %vm561 = vcmask 654912
        %v562 = vsel %vm561, %v560, %v555
        %v563 = vadd.s32 %v495, 4294967216
        %v564 = vlaneseq
        %v565 = vshrl.u32 %v564, 7
        %v566 = vsub.s32 %v563, %v565
        %v567 = vrot.slane %v417, %v566
        %vm568 = vcmask 720512
        %v569 = vsel %vm568, %v567, %v562
        %v570 = vadd.s32 %v495, 4294967208
        %v571 = vlaneseq
        %v572 = vshrl.u32 %v571, 7
        %v573 = vsub.s32 %v570, %v572
        %v574 = vrot.slane %v418, %v573
        %vm575 = vcmask 786112
        %v576 = vsel %vm575, %v574, %v569
        %v577 = vadd.s32 %v495, 4294967200
        %v578 = vlaneseq
        %v579 = vshrl.u32 %v578, 7
        %v580 = vsub.s32 %v577, %v579
        %v581 = vrot.slane %v419, %v580
        %vm582 = vcmask 851712
        %v583 = vsel %vm582, %v581, %v576
        %v584 = vadd.s32 %v495, 4294967192
        %v585 = vlaneseq
        %v586 = vshrl.u32 %v585, 7
        %v587 = vsub.s32 %v584, %v586
        %v588 = vrot.slane %v420, %v587
        %vm589 = vcmask 917312
        %v590 = vsel %vm589, %v588, %v583
        %v591 = vadd.s32 %v495, 4294967184
        %v592 = vlaneseq
        %v593 = vshrl.u32 %v592, 7
        %v594 = vsub.s32 %v591, %v593
        %v595 = vrot.slane %v421, %v594
        %vm596 = vcmask 982912
        %v597 = vsel %vm596, %v595, %v590
        %v598 = vadd.s32 %v495, 4294967176
        %v599 = vlaneseq
        %v600 = vshrl.u32 %v599, 7
        %v601 = vsub.s32 %v598, %v600
        %v602 = vrot.slane %v422, %v601
        %vm603 = vcmask 1048512
        %v604 = vsel %vm603, %v602, %v597
        %v605 = vlaneseq
        %v606 = vshrl.u32 %v605, 7
        %v607 = vsub.s32 %v495, %v606
        %v608 = vrot.slane %v423, %v607
        %v609 = vlaneseq
        %v610 = vshrl.u32 %v609, 7
        %v611 = vsub.s32 %v500, %v610
        %v612 = vrot.slane %v424, %v611
        %v613 = vsel %vm505, %v612, %v608
        %v614 = vlaneseq
        %v615 = vshrl.u32 %v614, 7
        %v616 = vsub.s32 %v507, %v615
        %v617 = vrot.slane %v425, %v616
        %v618 = vsel %vm512, %v617, %v613
        %v619 = vlaneseq
        %v620 = vshrl.u32 %v619, 7
        %v621 = vsub.s32 %v514, %v620
        %v622 = vrot.slane %v426, %v621
        %v623 = vsel %vm519, %v622, %v618
        %v624 = vlaneseq
        %v625 = vshrl.u32 %v624, 7
        %v626 = vsub.s32 %v521, %v625
        %v627 = vrot.slane %v427, %v626
        %v628 = vsel %vm526, %v627, %v623
        %v629 = vlaneseq
        %v630 = vshrl.u32 %v629, 7
        %v631 = vsub.s32 %v528, %v630
        %v632 = vrot.slane %v428, %v631
        %v633 = vsel %vm533, %v632, %v628
        %v634 = vlaneseq
        %v635 = vshrl.u32 %v634, 7
        %v636 = vsub.s32 %v535, %v635
        %v637 = vrot.slane %v429, %v636
        %v638 = vsel %vm540, %v637, %v633
        %v639 = vlaneseq
        %v640 = vshrl.u32 %v639, 7
        %v641 = vsub.s32 %v542, %v640
        %v642 = vrot.slane %v430, %v641
        %v643 = vsel %vm547, %v642, %v638
        %v644 = vlaneseq
        %v645 = vshrl.u32 %v644, 7
        %v646 = vsub.s32 %v549, %v645
        %v647 = vrot.slane %v431, %v646
        %v648 = vsel %vm554, %v647, %v643
        %v649 = vlaneseq
        %v650 = vshrl.u32 %v649, 7
        %v651 = vsub.s32 %v556, %v650
        %v652 = vrot.slane %v432, %v651
        %v653 = vsel %vm561, %v652, %v648
        %v654 = vlaneseq
        %v655 = vshrl.u32 %v654, 7
        %v656 = vsub.s32 %v563, %v655
        %v657 = vrot.slane %v433, %v656
        %v658 = vsel %vm568, %v657, %v653
        %v659 = vlaneseq
        %v660 = vshrl.u32 %v659, 7
        %v661 = vsub.s32 %v570, %v660
        %v662 = vrot.slane %v434, %v661
        %v663 = vsel %vm575, %v662, %v658
        %v664 = vlaneseq
        %v665 = vshrl.u32 %v664, 7
        %v666 = vsub.s32 %v577, %v665
        %v667 = vrot.slane %v435, %v666
        %v668 = vsel %vm582, %v667, %v663
        %v669 = vlaneseq
        %v670 = vshrl.u32 %v669, 7
        %v671 = vsub.s32 %v584, %v670
        %v672 = vrot.slane %v436, %v671
        %v673 = vsel %vm589, %v672, %v668
        %v674 = vlaneseq
        %v675 = vshrl.u32 %v674, 7
        %v676 = vsub.s32 %v591, %v675
        %v677 = vrot.slane %v437, %v676
        %v678 = vsel %vm596, %v677, %v673
        %v679 = vlaneseq
        %v680 = vshrl.u32 %v679, 7
        %v681 = vsub.s32 %v598, %v680
        %v682 = vrot.slane %v438, %v681
        %v683 = vsel %vm603, %v682, %v678
        %vm684 = vcmask 1041409
        %v685 = vsel %vm684, %v683, %v604
        %687 = vmatprep.subr.mxu0 0.0
        %688 = vmatpush1.msra.mxu0 %v439
        %689 = vmatprep.subr.mxu0 0.0
        %690 = vmatpush1.msra.mxu0 %v440
        %691 = vmatprep.subr.mxu0 0.0
        %692 = vmatpush1.msra.mxu0 %v441
        %693 = vmatprep.subr.mxu0 0.0
        %694 = vmatpush1.msra.mxu0 %v442
        %695 = vmatprep.subr.mxu0 0.0
        %696 = vmatpush1.msra.mxu0 %v443
        %697 = vmatprep.subr.mxu0 0.0
        %698 = vmatpush1.msra.mxu0 %v444
        %699 = vmatprep.subr.mxu0 0.0
        %700 = vmatpush1.msra.mxu0 %v445
        %701 = vmatprep.subr.mxu0 0.0
        %702 = vmatpush1.msra.mxu0 %v446
        %703 = vmatprep.subr.mxu0 0.0
        %704 = vmatpush1.msra.mxu0 %v447
        %705 = vmatprep.subr.mxu0 0.0
        %706 = vmatpush1.msra.mxu0 %v448
        %707 = vmatprep.subr.mxu0 0.0
        %708 = vmatpush1.msra.mxu0 %v449
        %709 = vmatprep.subr.mxu0 0.0
        %710 = vmatpush1.msra.mxu0 %v450
        %711 = vmatprep.subr.mxu0 0.0
        %712 = vmatpush1.msra.mxu0 %v451
        %713 = vmatprep.subr.mxu0 0.0
        %714 = vmatpush1.msra.mxu0 %v452
        %715 = vmatprep.subr.mxu0 0.0
        %716 = vmatpush1.msra.mxu0 %v453
        %717 = vmatprep.subr.mxu0 0.0
        %718 = vmatpush1.msra.mxu0 %v454
        %719 = vmatprep.subr.mxu0 0.0
        %720 = vmatpush1.msra.mxu0 0.0
        %721 = vmatprep.subr.mxu0 0.0
        %722 = vmatpush1.msra.mxu0 0.0
        %723 = vmatprep.subr.mxu0 0.0
        %724 = vmatpush1.msra.mxu0 0.0
        %725 = vmatprep.subr.mxu0 0.0
        %726 = vmatpush1.msra.mxu0 0.0
        %727 = vmatprep.subr.mxu0 0.0
        %728 = vmatpush1.msra.mxu0 0.0
        %729 = vmatprep.subr.mxu0 0.0
        %730 = vmatpush1.msra.mxu0 0.0
        %731 = vmatprep.subr.mxu0 0.0
        %732 = vmatpush1.msra.mxu0 0.0
        %733 = vmatprep.subr.mxu0 0.0
        %734 = vmatpush1.msra.mxu0 0.0
        %735 = vmatprep.subr.mxu0 0.0
        %736 = vmatpush1.msra.mxu0 0.0
        %737 = vmatprep.subr.mxu0 0.0
        %738 = vmatpush1.msra.mxu0 0.0
        %739 = vmatprep.subr.mxu0 0.0
        %740 = vmatpush1.msra.mxu0 0.0
        %741 = vmatprep.subr.mxu0 0.0
        %742 = vmatpush1.msra.mxu0 0.0
        %743 = vmatprep.subr.mxu0 0.0
        %744 = vmatpush1.msra.mxu0 0.0
        %745 = vmatprep.subr.mxu0 0.0
        %746 = vmatpush1.msra.mxu0 0.0
        %747 = vmatprep.subr.mxu0 0.0
        %748 = vmatpush1.msra.mxu0 0.0
        %749 = vmatprep.subr.mxu0 0.0
        %750 = vmatpush1.msra.mxu0 0.0
        %751 = vmatprep.mubr.f32.mxu0 0.0
        %752 = vmatmul.mubr.f32.gmra.mrb[0].mxu0 %v685
        %v753 = vpop.f32.mrb[0].mxu0
        %v754 = vadd.f32 %v460, %v753
        %v755 = vpop.f32.mrb[0].mxu0
        %756 = vdwg.mxu0
        %v757 = vmax.f32 %v754, 0.0
        %v758 = vld [vmem:[%s3] sm:$0xff]
        %v759 = vld [vmem:[%s4] sm:$0x1]
        %v761 = vlaneseq
        %v762 = vshrl.u32 %v761, 7
        %v763 = vsub.s32 0, %v762
        %v764 = vrot.slane %v759, %v763
        %vm766 = vcmask 64512
        %v768 = vsel %vm766, %v757, 0
        %770 = vmatprep.subr.mxu0 0.0
        %771 = vmatpush1.msra.mxu0 %v758
        %772 = vmatprep.subr.mxu0 0.0
        %773 = vmatpush1.msra.mxu0 0.0
        %774 = vmatprep.subr.mxu0 0.0
        %775 = vmatpush1.msra.mxu0 0.0
        %776 = vmatprep.subr.mxu0 0.0
        %777 = vmatpush1.msra.mxu0 0.0
        %778 = vmatprep.subr.mxu0 0.0
        %779 = vmatpush1.msra.mxu0 0.0
        %780 = vmatprep.subr.mxu0 0.0
        %781 = vmatpush1.msra.mxu0 0.0
        %782 = vmatprep.subr.mxu0 0.0
        %783 = vmatpush1.msra.mxu0 0.0
        %784 = vmatprep.subr.mxu0 0.0
        %785 = vmatpush1.msra.mxu0 0.0
        %786 = vmatprep.subr.mxu0 0.0
        %787 = vmatpush1.msra.mxu0 0.0
        %788 = vmatprep.subr.mxu0 0.0
        %789 = vmatpush1.msra.mxu0 0.0
        %790 = vmatprep.subr.mxu0 0.0
        %791 = vmatpush1.msra.mxu0 0.0
        %792 = vmatprep.subr.mxu0 0.0
        %793 = vmatpush1.msra.mxu0 0.0
        %794 = vmatprep.subr.mxu0 0.0
        %795 = vmatpush1.msra.mxu0 0.0
        %796 = vmatprep.subr.mxu0 0.0
        %797 = vmatpush1.msra.mxu0 0.0
        %798 = vmatprep.subr.mxu0 0.0
        %799 = vmatpush1.msra.mxu0 0.0
        %800 = vmatprep.subr.mxu0 0.0
        %801 = vmatpush1.msra.mxu0 0.0
        %802 = vmatprep.subr.mxu0 0.0
        %803 = vmatpush1.msra.mxu0 0.0
        %804 = vmatprep.subr.mxu0 0.0
        %805 = vmatpush1.msra.mxu0 0.0
        %806 = vmatprep.subr.mxu0 0.0
        %807 = vmatpush1.msra.mxu0 0.0
        %808 = vmatprep.subr.mxu0 0.0
        %809 = vmatpush1.msra.mxu0 0.0
        %810 = vmatprep.subr.mxu0 0.0
        %811 = vmatpush1.msra.mxu0 0.0
        %812 = vmatprep.subr.mxu0 0.0
        %813 = vmatpush1.msra.mxu0 0.0
        %814 = vmatprep.subr.mxu0 0.0
        %815 = vmatpush1.msra.mxu0 0.0
        %816 = vmatprep.subr.mxu0 0.0
        %817 = vmatpush1.msra.mxu0 0.0
        %818 = vmatprep.subr.mxu0 0.0
        %819 = vmatpush1.msra.mxu0 0.0
        %820 = vmatprep.subr.mxu0 0.0
        %821 = vmatpush1.msra.mxu0 0.0
        %822 = vmatprep.subr.mxu0 0.0
        %823 = vmatpush1.msra.mxu0 0.0
        %824 = vmatprep.subr.mxu0 0.0
        %825 = vmatpush1.msra.mxu0 0.0
        %826 = vmatprep.subr.mxu0 0.0
        %827 = vmatpush1.msra.mxu0 0.0
        %828 = vmatprep.subr.mxu0 0.0
        %829 = vmatpush1.msra.mxu0 0.0
        %830 = vmatprep.subr.mxu0 0.0
        %831 = vmatpush1.msra.mxu0 0.0
        %832 = vmatprep.subr.mxu0 0.0
        %833 = vmatpush1.msra.mxu0 0.0
        %834 = vmatprep.mubr.f32.mxu0 0.0
        %835 = vmatmul.mubr.f32.gmra.mrb[0].mxu0 %v768
        %v836 = vpop.f32.mrb[0].mxu0
        %v837 = vadd.f32 %v764, %v836
        %v838 = vpop.f32.mrb[0].mxu0
        %839 = vdwg.mxu0
        %v840 = vxor.u32 %v837, 2147483648
        %v841 = vmul.f32 %v840, 1.442695
        %v842 = vpow.pop %v841
        %v843 = vadd.f32 %v842, 1.0
        %v844 = vrcp.pop %v843
        %v845 = vmul.f32 1.0, %v844
        %v846 = vlaneseq
        %v847 = vshrl.u32 %v846, 7
        %v848 = vsub.s32 0, %v847
        %v849 = vrot.slane %v845, %v848
        %851 = vbcast.lane.b32.xlu0 %v849, 256
        %v852 = vpop.permute.xlu0 %851
        %s854 = sor.u32 256, 8
        %855 = vbcast.lane.b32.xlu0 %v849, %s854
        %v856 = vpop.permute.xlu0 %855
        %s858 = sor.u32 256, 16
        %859 = vbcast.lane.b32.xlu0 %v849, %s858
        %v860 = vpop.permute.xlu0 %859
        %s862 = sor.u32 256, 24
        %863 = vbcast.lane.b32.xlu0 %v849, %s862
        %v864 = vpop.permute.xlu0 %863
        %s866 = sor.u32 256, 32
        %867 = vbcast.lane.b32.xlu0 %v849, %s866
        %v868 = vpop.permute.xlu0 %867
        %s870 = sor.u32 256, 40
        %871 = vbcast.lane.b32.xlu0 %v849, %s870
        %v872 = vpop.permute.xlu0 %871
        %s874 = sor.u32 256, 48
        %875 = vbcast.lane.b32.xlu0 %v849, %s874
        %v876 = vpop.permute.xlu0 %875
        %s878 = sor.u32 256, 56
        %879 = vbcast.lane.b32.xlu0 %v849, %s878
        %v880 = vpop.permute.xlu0 %879
        %s882 = sor.u32 256, 64
        %883 = vbcast.lane.b32.xlu0 %v849, %s882
        %v884 = vpop.permute.xlu0 %883
        %s886 = sor.u32 256, 72
        %887 = vbcast.lane.b32.xlu0 %v849, %s886
        %v888 = vpop.permute.xlu0 %887
        %s890 = sor.u32 256, 80
        %891 = vbcast.lane.b32.xlu0 %v849, %s890
        %v892 = vpop.permute.xlu0 %891
        %s894 = sor.u32 256, 88
        %895 = vbcast.lane.b32.xlu0 %v849, %s894
        %v896 = vpop.permute.xlu0 %895
        %s898 = sor.u32 256, 96
        %899 = vbcast.lane.b32.xlu0 %v849, %s898
        %v900 = vpop.permute.xlu0 %899
        %s902 = sor.u32 256, 104
        %903 = vbcast.lane.b32.xlu0 %v849, %s902
        %v904 = vpop.permute.xlu0 %903
        %s906 = sor.u32 256, 112
        %907 = vbcast.lane.b32.xlu0 %v849, %s906
        %v908 = vpop.permute.xlu0 %907
        %s910 = sor.u32 256, 120
        %911 = vbcast.lane.b32.xlu0 %v849, %s910
        %v912 = vpop.permute.xlu0 %911
        %v913 = vlaneseq
        %v914 = vshrl.u32 %v913, 7
        %v915 = vsub.s32 1, %v914
        %v916 = vrot.slane %v845, %v915
        %918 = vbcast.lane.b32.xlu0 %v916, 256
        %v919 = vpop.permute.xlu0 %918
        %s921 = sor.u32 256, 8
        %922 = vbcast.lane.b32.xlu0 %v916, %s921
        %v923 = vpop.permute.xlu0 %922
        %s925 = sor.u32 256, 16
        %926 = vbcast.lane.b32.xlu0 %v916, %s925
        %v927 = vpop.permute.xlu0 %926
        %s929 = sor.u32 256, 24
        %930 = vbcast.lane.b32.xlu0 %v916, %s929
        %v931 = vpop.permute.xlu0 %930
        %s933 = sor.u32 256, 32
        %934 = vbcast.lane.b32.xlu0 %v916, %s933
        %v935 = vpop.permute.xlu0 %934
        %s937 = sor.u32 256, 40
        %938 = vbcast.lane.b32.xlu0 %v916, %s937
        %v939 = vpop.permute.xlu0 %938
        %s941 = sor.u32 256, 48
        %942 = vbcast.lane.b32.xlu0 %v916, %s941
        %v943 = vpop.permute.xlu0 %942
        %s945 = sor.u32 256, 56
        %946 = vbcast.lane.b32.xlu0 %v916, %s945
        %v947 = vpop.permute.xlu0 %946
        %s949 = sor.u32 256, 64
        %950 = vbcast.lane.b32.xlu0 %v916, %s949
        %v951 = vpop.permute.xlu0 %950
        %s953 = sor.u32 256, 72
        %954 = vbcast.lane.b32.xlu0 %v916, %s953
        %v955 = vpop.permute.xlu0 %954
        %s957 = sor.u32 256, 80
        %958 = vbcast.lane.b32.xlu0 %v916, %s957
        %v959 = vpop.permute.xlu0 %958
        %s961 = sor.u32 256, 88
        %962 = vbcast.lane.b32.xlu0 %v916, %s961
        %v963 = vpop.permute.xlu0 %962
        %s965 = sor.u32 256, 96
        %966 = vbcast.lane.b32.xlu0 %v916, %s965
        %v967 = vpop.permute.xlu0 %966
        %s969 = sor.u32 256, 104
        %970 = vbcast.lane.b32.xlu0 %v916, %s969
        %v971 = vpop.permute.xlu0 %970
        %s973 = sor.u32 256, 112
        %974 = vbcast.lane.b32.xlu0 %v916, %s973
        %v975 = vpop.permute.xlu0 %974
        %s977 = sor.u32 256, 120
        %978 = vbcast.lane.b32.xlu0 %v916, %s977
        %v979 = vpop.permute.xlu0 %978
        %v980 = vmul.f32 %v246, %v852
        %v981 = vmul.f32 %v247, %v852
        %v982 = vmul.f32 %v248, %v856
        %v983 = vmul.f32 %v249, %v856
        %v984 = vmul.f32 %v250, %v860
        %v985 = vmul.f32 %v251, %v860
        %v986 = vmul.f32 %v252, %v864
        %v987 = vmul.f32 %v253, %v864
        %v988 = vmul.f32 %v254, %v868
        %v989 = vmul.f32 %v255, %v868
        %v990 = vmul.f32 %v256, %v872
        %v991 = vmul.f32 %v257, %v872
        %v992 = vmul.f32 %v258, %v876
        %v993 = vmul.f32 %v259, %v876
        %v994 = vmul.f32 %v260, %v880
        %v995 = vmul.f32 %v261, %v880
        %v996 = vmul.f32 %v262, %v884
        %v997 = vmul.f32 %v263, %v884
        %v998 = vmul.f32 %v264, %v888
        %v999 = vmul.f32 %v265, %v888
        %v1000 = vmul.f32 %v266, %v892
        %v1001 = vmul.f32 %v267, %v892
        %v1002 = vmul.f32 %v268, %v896
        %v1003 = vmul.f32 %v269, %v896
        %v1004 = vmul.f32 %v270, %v900
        %v1005 = vmul.f32 %v271, %v900
        %v1006 = vmul.f32 %v272, %v904
        %v1007 = vmul.f32 %v273, %v904
        %v1008 = vmul.f32 %v274, %v908
        %v1009 = vmul.f32 %v275, %v908
        %v1010 = vmul.f32 %v276, %v912
        %v1011 = vmul.f32 %v277, %v912
        %v1012 = vmul.f32 %v278, %v919
        %v1013 = vmul.f32 %v279, %v919
        %v1014 = vmul.f32 %v280, %v923
        %v1015 = vmul.f32 %v281, %v923
        %v1016 = vmul.f32 %v282, %v927
        %v1017 = vmul.f32 %v283, %v927
        %v1018 = vmul.f32 %v284, %v931
        %v1019 = vmul.f32 %v285, %v931
        %v1020 = vmul.f32 %v286, %v935
        %v1021 = vmul.f32 %v287, %v935
        %v1022 = vmul.f32 %v288, %v939
        %v1023 = vmul.f32 %v289, %v939
        %v1024 = vmul.f32 %v290, %v943
        %v1025 = vmul.f32 %v291, %v943
        %v1026 = vmul.f32 %v292, %v947
        %v1027 = vmul.f32 %v293, %v947
        %v1028 = vmul.f32 %v294, %v951
        %v1029 = vmul.f32 %v295, %v951
        %v1030 = vmul.f32 %v296, %v955
        %v1031 = vmul.f32 %v297, %v955
        %v1032 = vmul.f32 %v298, %v959
        %v1033 = vmul.f32 %v299, %v959
        %v1034 = vmul.f32 %v300, %v963
        %v1035 = vmul.f32 %v301, %v963
        %v1036 = vmul.f32 %v302, %v967
        %v1037 = vmul.f32 %v303, %v967
        %v1038 = vmul.f32 %v304, %v971
        %v1039 = vmul.f32 %v305, %v971
        %v1040 = vmul.f32 %v306, %v975
        %v1041 = vmul.f32 %v307, %v975
        %v1042 = vmul.f32 %v308, %v979
        %v1043 = vmul.f32 %v309, %v979
        %1044 = vst [vmem:[%s243] sm:$0xff] %v980
        %1045 = vst [vmem:[%s243 + $0x8] sm:$0xff] %v981
        %1046 = vst [vmem:[%s243 + $0x10] sm:$0xff] %v982
        %1047 = vst [vmem:[%s243 + $0x18] sm:$0xff] %v983
        %1048 = vst [vmem:[%s243 + $0x20] sm:$0xff] %v984
        %1049 = vst [vmem:[%s243 + $0x28] sm:$0xff] %v985
        %1050 = vst [vmem:[%s243 + $0x30] sm:$0xff] %v986
        %1051 = vst [vmem:[%s243 + $0x38] sm:$0xff] %v987
        %1052 = vst [vmem:[%s243 + $0x40] sm:$0xff] %v988
        %1053 = vst [vmem:[%s243 + $0x48] sm:$0xff] %v989
        %1054 = vst [vmem:[%s243 + $0x50] sm:$0xff] %v990
        %1055 = vst [vmem:[%s243 + $0x58] sm:$0xff] %v991
        %1056 = vst [vmem:[%s243 + $0x60] sm:$0xff] %v992
        %1057 = vst [vmem:[%s243 + $0x68] sm:$0xff] %v993
        %1058 = vst [vmem:[%s243 + $0x70] sm:$0xff] %v994
        %1059 = vst [vmem:[%s243 + $0x78] sm:$0xff] %v995
        %1060 = vst [vmem:[%s243 + $0x80] sm:$0xff] %v996
        %1061 = vst [vmem:[%s243 + $0x88] sm:$0xff] %v997
        %1062 = vst [vmem:[%s243 + $0x90] sm:$0xff] %v998
        %1063 = vst [vmem:[%s243 + $0x98] sm:$0xff] %v999
        %1064 = vst [vmem:[%s243 + $0xa0] sm:$0xff] %v1000
        %1065 = vst [vmem:[%s243 + $0xa8] sm:$0xff] %v1001
        %1066 = vst [vmem:[%s243 + $0xb0] sm:$0xff] %v1002
        %1067 = vst [vmem:[%s243 + $0xb8] sm:$0xff] %v1003
        %1068 = vst [vmem:[%s243 + $0xc0] sm:$0xff] %v1004
        %1069 = vst [vmem:[%s243 + $0xc8] sm:$0xff] %v1005
        %1070 = vst [vmem:[%s243 + $0xd0] sm:$0xff] %v1006
        %1071 = vst [vmem:[%s243 + $0xd8] sm:$0xff] %v1007
        %1072 = vst [vmem:[%s243 + $0xe0] sm:$0xff] %v1008
        %1073 = vst [vmem:[%s243 + $0xe8] sm:$0xff] %v1009
        %1074 = vst [vmem:[%s243 + $0xf0] sm:$0xff] %v1010
        %1075 = vst [vmem:[%s243 + $0xf8] sm:$0xff] %v1011
        %1076 = vst [vmem:[%s243 + $0x100] sm:$0xff] %v1012
        %1077 = vst [vmem:[%s243 + $0x108] sm:$0xff] %v1013
        %1078 = vst [vmem:[%s243 + $0x110] sm:$0xff] %v1014
        %1079 = vst [vmem:[%s243 + $0x118] sm:$0xff] %v1015
        %1080 = vst [vmem:[%s243 + $0x120] sm:$0xff] %v1016
        %1081 = vst [vmem:[%s243 + $0x128] sm:$0xff] %v1017
        %1082 = vst [vmem:[%s243 + $0x130] sm:$0xff] %v1018
        %1083 = vst [vmem:[%s243 + $0x138] sm:$0xff] %v1019
        %1084 = vst [vmem:[%s243 + $0x140] sm:$0xff] %v1020
        %1085 = vst [vmem:[%s243 + $0x148] sm:$0xff] %v1021
        %1086 = vst [vmem:[%s243 + $0x150] sm:$0xff] %v1022
        %1087 = vst [vmem:[%s243 + $0x158] sm:$0xff] %v1023
        %1088 = vst [vmem:[%s243 + $0x160] sm:$0xff] %v1024
        %1089 = vst [vmem:[%s243 + $0x168] sm:$0xff] %v1025
        %1090 = vst [vmem:[%s243 + $0x170] sm:$0xff] %v1026
        %1091 = vst [vmem:[%s243 + $0x178] sm:$0xff] %v1027
        %1092 = vst [vmem:[%s243 + $0x180] sm:$0xff] %v1028
        %1093 = vst [vmem:[%s243 + $0x188] sm:$0xff] %v1029
        %1094 = vst [vmem:[%s243 + $0x190] sm:$0xff] %v1030
        %1095 = vst [vmem:[%s243 + $0x198] sm:$0xff] %v1031
        %1096 = vst [vmem:[%s243 + $0x1a0] sm:$0xff] %v1032
        %1097 = vst [vmem:[%s243 + $0x1a8] sm:$0xff] %v1033
        %1098 = vst [vmem:[%s243 + $0x1b0] sm:$0xff] %v1034
        %1099 = vst [vmem:[%s243 + $0x1b8] sm:$0xff] %v1035
        %1100 = vst [vmem:[%s243 + $0x1c0] sm:$0xff] %v1036
        %1101 = vst [vmem:[%s243 + $0x1c8] sm:$0xff] %v1037
        %1102 = vst [vmem:[%s243 + $0x1d0] sm:$0xff] %v1038
        %1103 = vst [vmem:[%s243 + $0x1d8] sm:$0xff] %v1039
        %1104 = vst [vmem:[%s243 + $0x1e0] sm:$0xff] %v1040
        %1105 = vst [vmem:[%s243 + $0x1e8] sm:$0xff] %v1041
        %1106 = vst [vmem:[%s243 + $0x1f0] sm:$0xff] %v1042
        %1107 = vst [vmem:[%s243 + $0x1f8] sm:$0xff] %v1043
        %s1108 = sand.u32 %s140, 1
        %s1109 = scalar_lea.sflag [#allocation4], %s1108
        %s1110 = sand.u32 %s140, 1
        %s1111 = smul.addr %s1110, 512
        %s1112 = scalar_lea.vmem [#allocation5], %s1111
        // Predicated region
        $region45: #{tpu_custom_call.1} parent=39 // pred_check
          %p1113 = pneg %p150
        $region46: #{tpu_custom_call.1} parent=39 // pred_check_branch
          %1115 = sbr.rel (%p1113) target = $region48
        $region47: #{tpu_custom_call.1} parent=39 // pred_region
          %s1116 = smul.u32 2, %s22
          %s1118 = ssub.s32 8192, 8192
          %1119 = vsyncadd %s1109, %s1118
          %s1120 = smul.addr %s1116, 32
          %s1121 = smul.addr %s1120, 128
          %s1122 = scalar_lea.hbm %s5, %s1121
          %s1123 = sshll.u32 %s1112, 4
          %s1124 = int_to_ptr.vmem [resolvable:$true] %s1123
          %1129 = dma.vmem_to_hbm [thread:$0]  %s1124, 8192, %s1122, %s1109, 256, 256, 16
        $region48: #{tpu_custom_call.1} parent=39 // pred_fallthru
          _
      $region40: #{tpu_custom_call.1} parent=5 // pred_fallthru
        _
      %p1130 = scmp.le.s32.totalorder 2, %s17
      // Predicated region
      $region49: #{tpu_custom_call.1} parent=5 // pred_check
        %p1131 = pneg %p1130
      $region50: #{tpu_custom_call.1} parent=5 // pred_check_branch
        %1133 = sbr.rel (%p1131) target = $region52
      $region51: #{tpu_custom_call.1} parent=5 // pred_region
        %s1134 = ssub.s32 %s17, 2
        // Predicated region
        $region53: #{tpu_custom_call.1} parent=51 // pred_check
          %p1135 = pneg %p156
        $region54: #{tpu_custom_call.1} parent=51 // pred_check_branch
          %1137 = sbr.rel (%p1135) target = $region56
        $region55: #{tpu_custom_call.1} parent=51 // pred_region
          %s1138 = sand.u32 %s141, 1
          %s1139 = scalar_lea.sflag [#allocation4], %s1138
          %s1140 = sand.u32 %s141, 1
          %s1141 = smul.addr %s1140, 512
          %s1142 = scalar_lea.vmem [#allocation5], %s1141
          %1143 = dma.done %s1139, 8192
        $region56: #{tpu_custom_call.1} parent=51 // pred_fallthru
          _
      $region52: #{tpu_custom_call.1} parent=5 // pred_fallthru
        _
    $region6: #{tpu_custom_call.1} parent=1 // loop_footer
      %s21 = sadd.s32 1, %s17
    $region7: #{tpu_custom_call.1} parent=1 // loop_footer_branch
      %16 = sbr.rel target = $region3
    $region8: #{tpu_custom_call.1} parent=1 // loop_exit
      _
    %1144 = vsyncpa [#allocation3], 1
    %s1145 = scalar_lea.sflag [#allocation3], 1
    %1146 = vsyncpa %s1145, 1
    %1147 = vsyncpa [#allocation4], 1
    %s1148 = scalar_lea.sflag [#allocation4], 1
    %1149 = vsyncpa %s1148, 1

</llo_original>
